<compile_context>
chip_gen: v7x
topology: tpu7x:2x2x1
jax: 0.10.0
libtpu: 0.0.40
codegen_flags: <defaults>
</compile_context>

<pallas_src>
import functools

import jax
import jax.numpy as jnp
from jax import lax
from jax.experimental import pallas as pl
from jax.experimental.pallas import tpu as pltpu


_LANE = 128
_MAX_TS = 4096          # lane-tile cap (HBM roofline saturates ~512+ lanes)


def _round_up(a, b):
    return (a + b - 1) // b * b


@functools.lru_cache(maxsize=None)
def _vmem_budget():
    """(vmem_limit_bytes, tile_budget_bytes), derived from the actual chip."""
    try:
        cap = int(getattr(pltpu.get_tpu_info(), "vmem_capacity_bytes", 0)) or (64 << 20)
    except Exception:                       # interpret mode / query unavailable
        cap = 64 << 20                      # conservative: v7x per-core VMEM
    vmem_limit = min(int(cap * 0.6), 100 << 20)   # leave headroom for compiler scratch
    tile_budget = vmem_limit // 2                 # budget for double-buffered data tiles
    return vmem_limit, tile_budget


def _choose_tiles(R, S, itemsize, tile_budget):
    """Pick (row_tile, lane_tile) for the (R=B*C, S=H*W) view.

    lane_tile is a multiple of 128; row_tile is a multiple of the sublane packing
    (or the full row extent, which is always a legal block dim).  Sized so ~4
    double-buffered tiles (pass-2 worst case) fit inside tile_budget.
    """
    sub = 8 if itemsize >= 4 else 16        # bf16/fp8 pack rows into sublanes
    s_pad = _round_up(max(S, 1), _LANE)

    ts = min(s_pad, _MAX_TS)
    ts_cap = max(_LANE, (tile_budget // (4 * sub * itemsize)) // _LANE * _LANE)
    ts = max(_LANE, min(ts, ts_cap))

    tr_cap = max(sub, (tile_budget // (4 * ts * itemsize)) // sub * sub)
    if R >= 2 * sub:
        # keep >= 2 row tiles so the "parallel" row axis feeds both v7x TensorCores
        tr_cap = min(tr_cap, _round_up(pl.cdiv(R, 2), sub))
    if tr_cap >= R or R <= sub:
        tr = R                               # full row extent
    else:
        tr = max(sub, (tr_cap // sub) * sub)
    return tr, ts


def _pool_kernel(x_ref, sum_ref, max_ref, *, rem, n_s):
    """Per-row sum & max over the lane (spatial) axis.

    x_ref: (TR, TS) native dtype.  sum_ref/max_ref: (TR, 1) f32 accumulators,
    resident in VMEM across the S grid axis.  `rem` (static) = number of valid
    lanes in the ragged last S tile (0 if S % TS == 0); out-of-bounds lanes of a
    partial block contain garbage and must be masked for BOTH reductions.
    """
    si = pl.program_id(1)

    @pl.when(si == 0)
    def _init():
        sum_ref[...] = jnp.zeros_like(sum_ref)
        max_ref[...] = jnp.full_like(max_ref, -jnp.inf)

    x = x_ref[...]                                     # keep native dtype

    def _accum(x_sum_f32, x_max):
        sum_ref[...] += jnp.sum(x_sum_f32, axis=1, keepdims=True)
        max_ref[...] = jnp.maximum(
            max_ref[...],
            jnp.max(x_max, axis=1, keepdims=True).astype(jnp.float32))

    if rem:                                            # static: only when S % TS != 0
        last = n_s - 1

        @pl.when(si == last)                           # ragged tail: mask sum AND max
        def _tail():
            col = lax.broadcasted_iota(jnp.int32, x.shape, 1)
            valid = col < rem
            # TODO(synk): the -inf sentinel assumes a floating-point x dtype.
            _accum(jnp.where(valid, x.astype(jnp.float32), 0.0),
                   jnp.where(valid, x, jnp.asarray(-jnp.inf, dtype=x.dtype)))

        @pl.when(si != last)                           # full tiles pay no masking cost
        def _full():
            _accum(x.astype(jnp.float32), x)
    else:
        _accum(x.astype(jnp.float32), x)


def _scale_kernel(x_ref, gate_ref, o_ref):
    # x_ref/o_ref: (TR, TS) native dtype; gate_ref: (TR, 1) f32.
    o_ref[...] = x_ref[...] * gate_ref[...].astype(o_ref.dtype)   # broadcast over lanes


@jax.jit
def channel_gate(x, w1, b1, w2, b2):
    """x: (B, C, H, W). Returns x * sigmoid(MLP(avg_pool(x)) + MLP(max_pool(x)))."""
    B, C, H, W = x.shape
    S = H * W
    R = B * C
    itemsize = jnp.dtype(x.dtype).itemsize
    vmem_limit, tile_budget = _vmem_budget()
    tr, ts = _choose_tiles(R, S, itemsize, tile_budget)
    n_r = pl.cdiv(R, tr)
    n_s = pl.cdiv(S, ts)
    rem = S % ts                                   # valid lanes of the ragged tail tile

    x2d = x.reshape(R, S)                          # free contiguous view; no padding pass

    # ---- pass 1: per-(batch, channel) sum & max over the spatial axis ----------
    pool_kernel = functools.partial(_pool_kernel, rem=rem, n_s=n_s)
    sum_out, max_out = pl.pallas_call(
        pool_kernel,
        out_shape=(jax.ShapeDtypeStruct((R, 1), jnp.float32),
                   jax.ShapeDtypeStruct((R, 1), jnp.float32)),
        grid_spec=pltpu.PrefetchScalarGridSpec(
            num_scalar_prefetch=0,
            grid=(n_r, n_s),
            in_specs=[pl.BlockSpec((tr, ts), lambda r, s: (r, s))],
            out_specs=[pl.BlockSpec((tr, 1), lambda r, s: (r, 0)),
                       pl.BlockSpec((tr, 1), lambda r, s: (r, 0))],
        ),
        compiler_params=pltpu.CompilerParams(
            dimension_semantics=("parallel", "arbitrary"),
            vmem_limit_bytes=vmem_limit),
        cost_estimate=pl.CostEstimate(
            flops=2 * R * S, transcendentals=0,
            bytes_accessed=R * S * itemsize + 2 * R * 4),
    )(x2d)

    # ---- tiny fused MLP (shared weights, avg & max stacked) + sigmoid ----------
    avg = sum_out[:, 0].reshape(B, C) * (1.0 / S)      # divide by the TRUE H*W
    mx = max_out[:, 0].reshape(B, C)
    pooled = jnp.stack([avg, mx], axis=1)              # (B, 2, C)
    h = jnp.maximum(pooled @ w1 + b1, 0.0)             # (B, 2, Ch)
    att = (h @ w2 + b2).sum(axis=1)                    # (B, C); b2 added twice, as in reference
    gate = jax.nn.sigmoid(att).astype(jnp.float32).reshape(R, 1)

    # ---- pass 2: broadcast the per-channel gate over the spatial axis ----------
    out2d = pl.pallas_call(
        _scale_kernel,
        out_shape=jax.ShapeDtypeStruct((R, S), x.dtype),
        grid_spec=pltpu.PrefetchScalarGridSpec(
            num_scalar_prefetch=0,
            grid=(n_r, n_s),
            in_specs=[pl.BlockSpec((tr, ts), lambda r, s: (r, s)),
                      pl.BlockSpec((tr, 1), lambda r, s: (r, 0))],
            out_specs=pl.BlockSpec((tr, ts), lambda r, s: (r, s)),
        ),
        compiler_params=pltpu.CompilerParams(
            dimension_semantics=("parallel", "parallel"),
            vmem_limit_bytes=vmem_limit),
        cost_estimate=pl.CostEstimate(
            flops=R * S, transcendentals=0,
            bytes_accessed=2 * R * S * itemsize + R * 4),
    )(x2d, gate)

    return out2d.reshape(B, C, H, W)                   # free contiguous view


def reference_channel_gate(x, w1, b1, w2, b2):
    pooled_avg = x.mean(axis=(2, 3))                   # (B, C)
    pooled_max = x.max(axis=(2, 3))                    # (B, C)

    def mlp(p):
        h = jnp.maximum(p @ w1 + b1, 0.0)
        return h @ w2 + b2

    att = mlp(pooled_avg) + mlp(pooled_max)
    scale = jax.nn.sigmoid(att)[:, :, None, None]
    return x * scale


if __name__ == "__main__":
    key = jax.random.PRNGKey(0)

    def run_case(case_key, B, C, H, W, reduction_ratio=16):
        Ch = max(1, C // reduction_ratio)              # hidden width of the MLP
        k_x, k_w1, k_b1, k_w2, k_b2 = jax.random.split(case_key, 5)
        x = jax.random.normal(k_x, (B, C, H, W), dtype=jnp.float32)
        # Linear(C, Ch) and Linear(Ch, C) stored as (in, out): p @ W + b.
        w1 = jax.random.normal(k_w1, (C, Ch), dtype=jnp.float32) * 0.1
        b1 = jax.random.normal(k_b1, (Ch,), dtype=jnp.float32) * 0.1
        w2 = jax.random.normal(k_w2, (Ch, C), dtype=jnp.float32) * 0.1
        b2 = jax.random.normal(k_b2, (C,), dtype=jnp.float32) * 0.1

        out = jax.block_until_ready(channel_gate(x, w1, b1, w2, b2))
        ref = reference_channel_gate(x, w1, b1, w2, b2)
        assert out.shape == (B, C, H, W)
        assert jnp.allclose(out, ref, atol=1e-5, rtol=1e-5), (
            f"mismatch vs reference for shape {(B, C, H, W)}")

    k1, k2, k3 = jax.random.split(key, 3)
    run_case(k1, B=2, C=32, H=16, W=16)   # S = 256: lane-aligned, no tail mask
    run_case(k2, B=3, C=64, H=7, W=7)     # S = 49: ragged last tile (masked sum+max)
    run_case(k3, B=1, C=8, H=5, W=5)      # tiny: full-extent row block, B=1 path
    print("KERNEL_OK")
</pallas_src>

<mosaic_0001>
module attributes {stable_mosaic.version = 11 : i64} {
  func.func @_pool_kernel(%arg0: i32, %arg1: i32, %arg2: memref<32x256xf32, #tpu.memory_space<vmem>>, %arg3: memref<32x1xf32, #tpu.memory_space<vmem>>, %arg4: memref<32x1xf32, #tpu.memory_space<vmem>>) attributes {dimension_semantics = [#tpu.dimension_semantics<parallel>, #tpu.dimension_semantics<arbitrary>], iteration_bounds = array<i64: 2, 1>, scalar_prefetch = 0 : i64, scratch_operands = 0 : i64, tpu.core_type = #tpu.core_type<tc>, window_params = [{transform_indices = @transform_0, window_bounds = array<i64: 32, 256>}, {transform_indices = @transform_1, window_bounds = array<i64: 32, 1>}, {transform_indices = @transform_2, window_bounds = array<i64: 32, 1>}]} {
    %c0_i32 = arith.constant 0 : i32
    %0 = arith.cmpi eq, %arg1, %c0_i32 : i32
    %1 = arith.extui %0 : i1 to i32
    %c0_i32_0 = arith.constant 0 : i32
    %2 = arith.cmpi ne, %1, %c0_i32_0 : i32
    scf.if %2 {
      %cst_11 = arith.constant 0.000000e+00 : f32
      %14 = vector.broadcast %cst_11 : f32 to vector<32x1xf32>
      %c0_12 = arith.constant 0 : index
      %c0_13 = arith.constant 0 : index
      %15 = vector.load %arg3[%c0_12, %c0_13] : memref<32x1xf32, #tpu.memory_space<vmem>>, vector<32x1xf32>
      tpu.vector_store %arg3[%c0_12, %c0_13], %14 {strides = array<i32>} : memref<32x1xf32, #tpu.memory_space<vmem>>, vector<32x1xf32>,
      %cst_14 = arith.constant 0xFF800000 : f32
      %16 = vector.broadcast %cst_14 : f32 to vector<32x1xf32>
      %c0_15 = arith.constant 0 : index
      %c0_16 = arith.constant 0 : index
      %17 = vector.load %arg4[%c0_15, %c0_16] : memref<32x1xf32, #tpu.memory_space<vmem>>, vector<32x1xf32>
      tpu.vector_store %arg4[%c0_15, %c0_16], %16 {strides = array<i32>} : memref<32x1xf32, #tpu.memory_space<vmem>>, vector<32x1xf32>,
    } else {
    }
    %c0 = arith.constant 0 : index
    %c0_1 = arith.constant 0 : index
    %3 = vector.load %arg2[%c0, %c0_1] : memref<32x256xf32, #tpu.memory_space<vmem>>, vector<32x256xf32>
    %c0_2 = arith.constant 0 : index
    %c0_3 = arith.constant 0 : index
    %4 = vector.load %arg3[%c0_2, %c0_3] : memref<32x1xf32, #tpu.memory_space<vmem>>, vector<32x1xf32>
    %cst = arith.constant dense<0.000000e+00> : vector<32xf32>
    %5 = vector.multi_reduction <add>, %3, %cst [1] : vector<32x256xf32> to vector<32xf32>
    %6 = vector.shape_cast %5 : vector<32xf32> to vector<32x1xf32>
    %7 = arith.addf %4, %6 : vector<32x1xf32>
    %c0_4 = arith.constant 0 : index
    %c0_5 = arith.constant 0 : index
    %8 = vector.load %arg3[%c0_4, %c0_5] : memref<32x1xf32, #tpu.memory_space<vmem>>, vector<32x1xf32>
    tpu.vector_store %arg3[%c0_4, %c0_5], %7 {strides = array<i32>} : memref<32x1xf32, #tpu.memory_space<vmem>>, vector<32x1xf32>,
    %c0_6 = arith.constant 0 : index
    %c0_7 = arith.constant 0 : index
    %9 = vector.load %arg4[%c0_6, %c0_7] : memref<32x1xf32, #tpu.memory_space<vmem>>, vector<32x1xf32>
    %cst_8 = arith.constant dense<0xFF800000> : vector<32xf32>
    %10 = vector.multi_reduction <maximumf>, %3, %cst_8 [1] : vector<32x256xf32> to vector<32xf32>
    %11 = vector.shape_cast %10 : vector<32xf32> to vector<32x1xf32>
    %12 = arith.maximumf %9, %11 : vector<32x1xf32>
    %c0_9 = arith.constant 0 : index
    %c0_10 = arith.constant 0 : index
    %13 = vector.load %arg4[%c0_9, %c0_10] : memref<32x1xf32, #tpu.memory_space<vmem>>, vector<32x1xf32>
    tpu.vector_store %arg4[%c0_9, %c0_10], %12 {strides = array<i32>} : memref<32x1xf32, #tpu.memory_space<vmem>>, vector<32x1xf32>,
    return
  }
  func.func @transform_0(%arg0: i32, %arg1: i32) -> (i32, i32) {
    %c0_i32 = arith.constant 0 : i32
    return %arg0, %arg1 : i32, i32
  }
  func.func @transform_1(%arg0: i32, %arg1: i32) -> (i32, i32) {
    %c0_i32 = arith.constant 0 : i32
    %c0_i32_0 = arith.constant 0 : i32
    return %arg0, %c0_i32 : i32, i32
  }
  func.func @transform_2(%arg0: i32, %arg1: i32) -> (i32, i32) {
    %c0_i32 = arith.constant 0 : i32
    %c0_i32_0 = arith.constant 0 : i32
    return %arg0, %c0_i32 : i32, i32
  }
}

module attributes {stable_mosaic.version = 11 : i64} {
  func.func @_scale_kernel(%arg0: i32, %arg1: i32, %arg2: memref<32x256xf32, #tpu.memory_space<vmem>>, %arg3: memref<32x1xf32, #tpu.memory_space<vmem>>, %arg4: memref<32x256xf32, #tpu.memory_space<vmem>>) attributes {dimension_semantics = [#tpu.dimension_semantics<parallel>, #tpu.dimension_semantics<parallel>], iteration_bounds = array<i64: 2, 1>, scalar_prefetch = 0 : i64, scratch_operands = 0 : i64, tpu.core_type = #tpu.core_type<tc>, window_params = [{transform_indices = @transform_0, window_bounds = array<i64: 32, 256>}, {transform_indices = @transform_1, window_bounds = array<i64: 32, 1>}, {transform_indices = @transform_2, window_bounds = array<i64: 32, 256>}]} {
    %c0 = arith.constant 0 : index
    %c0_0 = arith.constant 0 : index
    %0 = vector.load %arg2[%c0, %c0_0] : memref<32x256xf32, #tpu.memory_space<vmem>>, vector<32x256xf32>
    %c0_1 = arith.constant 0 : index
    %c0_2 = arith.constant 0 : index
    %1 = vector.load %arg3[%c0_1, %c0_2] : memref<32x1xf32, #tpu.memory_space<vmem>>, vector<32x1xf32>
    %2 = vector.broadcast %1 : vector<32x1xf32> to vector<32x256xf32>
    %3 = arith.mulf %0, %2 : vector<32x256xf32>
    %c0_3 = arith.constant 0 : index
    %c0_4 = arith.constant 0 : index
    %4 = vector.load %arg4[%c0_3, %c0_4] : memref<32x256xf32, #tpu.memory_space<vmem>>, vector<32x256xf32>
    tpu.vector_store %arg4[%c0_3, %c0_4], %3 {strides = array<i32>} : memref<32x256xf32, #tpu.memory_space<vmem>>, vector<32x256xf32>,
    return
  }
  func.func @transform_0(%arg0: i32, %arg1: i32) -> (i32, i32) {
    %c0_i32 = arith.constant 0 : i32
    return %arg0, %arg1 : i32, i32
  }
  func.func @transform_1(%arg0: i32, %arg1: i32) -> (i32, i32) {
    %c0_i32 = arith.constant 0 : i32
    %c0_i32_0 = arith.constant 0 : i32
    return %arg0, %c0_i32 : i32, i32
  }
  func.func @transform_2(%arg0: i32, %arg1: i32) -> (i32, i32) {
    %c0_i32 = arith.constant 0 : i32
    return %arg0, %arg1 : i32, i32
  }
}

</mosaic_0001>

<llo_original>
// kernel: channel_gate.2
$region0: #{channel_gate.2}
  #allocation0 [shape = 'u32[]', space=smem, size = 0x4, offset = 0x4, fixed_abs, tag = 'smem constant byte address 0x4 - core index']
  #allocation1 [shape = 'u32[144,128]{1,0:T(1,128)}', space=vmem, size = 0x12000, scoped, tag = 'internal scratch']
  %s0 = inlined_call_operand.vmem [shape: f32[64,256], index: 0, kind: input, shape index: {}]
  %s1 = inlined_call_operand.vmem [shape: f32[64,1], index: 1, kind: output, shape index: {0}]
  %s2 = inlined_call_operand.vmem [shape: f32[64,1], index: 2, kind: output, shape index: {1}]
  %3 = xla_tuple %s1, %s2
  %s4 = sld [smem:[#allocation0]]
  $region49: #{channel_gate.2} parent=0
    _
  %s6 = ssub.s32 1, %s4
  %s7 = scalar_select 0, %s6, %s4
  loop: start=0, step=1, limit=4
  $region2: #{channel_gate.2} parent=0 // loop_pre_header
    _
  $region3: #{channel_gate.2} parent=0 // loop_header
    %s9 = sphi 0, %s13
    %p10 = scmp.ge.s32.totalorder %s9, 4
    %s16 = sphi 0, %s28
    %s17 = sphi 0, %s24
    %s18 = sphi 0, %s16
    %s19 = sphi 0, %s17
    %s20 = sphi 0, %s18
    %s21 = sphi 0, %s19
    %s33 = sphi 0, %s35
    %s36 = sphi 0, %s33
    %s37 = sphi 0, %s36
    %s53 = sphi 0, %s37
    %s59 = sphi 0, %s61
    %s62 = sphi 0, %s59
    %s63 = sphi 0, %s62
    %s79 = sphi 0, %s63
    %s85 = sphi 0, %s87
    %s88 = sphi 0, %s85
    %s89 = sphi 0, %s88
    %s105 = sphi 0, %s89
  $region4: #{channel_gate.2} parent=0 // loop_header_branch
    %12 = sbr.rel (%p10) target = $region8
  $region5: #{channel_gate.2} parent=0 // loop_body
    %s14 = ssub.s32 %s9, 1
    %s15 = ssub.s32 %s9, 2
    %s22 = sadd.s32 1, %s17
    %p23 = scmp.ge.s32.totalorder %s22, 1
    %s24 = scalar_select %p23, 0, %s22
    %s25 = sadd.s32 1, %s16
    %s26 = scalar_select %p23, %s25, %s16
    %p27 = scmp.ge.s32.totalorder %s26, 2
    %s28 = scalar_select %p27, 0, %s26
    %s29 = ssub.s32 %s16, %s28
    %s30 = ssub.s32 %s17, %s24
    %s31 = sor.u32 %s29, %s30
    %p32 = scmp.eq.s32.totalorder %s31, 0
    %s34 = sadd.s32 %s33, 1
    %s35 = scalar_select %p32, %s33, %s34
    %p38 = pneg %p32
    %p39 = scmp.eq.s32.totalorder %s9, 1
    %p40 = por %p38, %p39
    %p41 = scmp.ne.s32.totalorder %s33, %s36
    %p42 = scmp.eq.s32.totalorder %s9, 0
    %p43 = por %p41, %p42
    %p44 = scmp.ne.s32.totalorder %s33, %s36
    %p45 = scmp.eq.s32.totalorder %s14, 1
    %p46 = por %p44, %p45
    %p47 = scmp.ne.s32.totalorder %s36, %s37
    %p48 = scmp.eq.s32.totalorder %s14, 0
    %p49 = por %p47, %p48
    %p50 = scmp.ne.s32.totalorder %s36, %s37
    %p51 = scmp.eq.s32.totalorder %s15, 1
    %p52 = por %p50, %p51
    %p54 = scmp.ne.s32.totalorder %s37, %s53
    %p55 = scmp.eq.s32.totalorder %s15, 0
    %p56 = por %p54, %p55
    %s57 = ssub.s32 %s16, %s28
    %p58 = scmp.eq.s32.totalorder %s57, 0
    %s60 = sadd.s32 %s59, 1
    %s61 = scalar_select %p58, %s59, %s60
    %p64 = pneg %p58
    %p65 = scmp.eq.s32.totalorder %s9, 1
    %p66 = por %p64, %p65
    %p67 = scmp.ne.s32.totalorder %s59, %s62
    %p68 = scmp.eq.s32.totalorder %s9, 0
    %p69 = por %p67, %p68
    %p70 = scmp.ne.s32.totalorder %s59, %s62
    %p71 = scmp.eq.s32.totalorder %s14, 1
    %p72 = por %p70, %p71
    %p73 = scmp.ne.s32.totalorder %s62, %s63
    %p74 = scmp.eq.s32.totalorder %s14, 0
    %p75 = por %p73, %p74
    %p76 = scmp.ne.s32.totalorder %s62, %s63
    %p77 = scmp.eq.s32.totalorder %s15, 1
    %p78 = por %p76, %p77
    %p80 = scmp.ne.s32.totalorder %s63, %s79
    %p81 = scmp.eq.s32.totalorder %s15, 0
    %p82 = por %p80, %p81
    %s83 = ssub.s32 %s16, %s28
    %p84 = scmp.eq.s32.totalorder %s83, 0
    %s86 = sadd.s32 %s85, 1
    %s87 = scalar_select %p84, %s85, %s86
    %p90 = pneg %p84
    %p91 = scmp.eq.s32.totalorder %s9, 1
    %p92 = por %p90, %p91
    %p93 = scmp.ne.s32.totalorder %s85, %s88
    %p94 = scmp.eq.s32.totalorder %s9, 0
    %p95 = por %p93, %p94
    %p96 = scmp.ne.s32.totalorder %s85, %s88
    %p97 = scmp.eq.s32.totalorder %s14, 1
    %p98 = por %p96, %p97
    %p99 = scmp.ne.s32.totalorder %s88, %s89
    %p100 = scmp.eq.s32.totalorder %s14, 0
    %p101 = por %p99, %p100
    %p102 = scmp.ne.s32.totalorder %s88, %s89
    %p103 = scmp.eq.s32.totalorder %s15, 1
    %p104 = por %p102, %p103
    %p106 = scmp.ne.s32.totalorder %s89, %s105
    %p107 = scmp.eq.s32.totalorder %s15, 0
    %p108 = por %p106, %p107
    %p109 = scmp.le.s32.totalorder 1, %s9
    %p110 = scmp.lt.s32.totalorder %s9, 3
    %p111 = pnand %p109, %p110
    %p112 = pneg %p111
    // Predicated region
    $region9: #{channel_gate.2} parent=5 // pred_check
      _
    $region10: #{channel_gate.2} parent=5 // pred_check_branch
      %114 = sbr.rel (%p111) target = $region12
    $region11: #{channel_gate.2} parent=5 // pred_region
      %s115 = ssub.s32 %s9, 1
    $region12: #{channel_gate.2} parent=5 // pred_fallthru
      _
    %p116 = scmp.lt.s32.totalorder %s9, 2
    // Predicated region
    $region13: #{channel_gate.2} parent=5 // pred_check
      %p117 = pneg %p116
    $region14: #{channel_gate.2} parent=5 // pred_check_branch
      %119 = sbr.rel (%p117) target = $region16
    $region15: #{channel_gate.2} parent=5 // pred_region
      // Predicated region
      $region17: #{channel_gate.2} parent=15 // pred_check
        %p120 = pneg %p43
      $region18: #{channel_gate.2} parent=15 // pred_check_branch
        %122 = sbr.rel (%p120) target = $region20
      $region19: #{channel_gate.2} parent=15 // pred_region
        %s123 = smul.u32 4, %s16
        %s124 = smul.u32 2, %s17
        %p125 = scmp.lt.s32.totalorder %s123, 7
        %s126 = scalar_select %p125, %s123, 7
        %p127 = scmp.lt.s32.totalorder %s124, 1
        %s128 = scalar_select %p127, %s124, 1
        %s129 = smul.addr %s126, 2
        %s130 = sadd.s32 %s128, %s129
        %s131 = smul.addr %s130, 8
        %s132 = scalar_lea.vmem %s0, %s131
        %s133 = smul.u32 4, %s16
        %s134 = smul.u32 2, %s17
      $region20: #{channel_gate.2} parent=15 // pred_fallthru
        _
    $region16: #{channel_gate.2} parent=5 // pred_fallthru
      _
    %p135 = scmp.le.s32.totalorder 1, %s9
    %p136 = scmp.lt.s32.totalorder %s9, 3
    %p137 = pnand %p135, %p136
    %p138 = pneg %p137
    // Predicated region
    $region21: #{channel_gate.2} parent=5 // pred_check
      _
    $region22: #{channel_gate.2} parent=5 // pred_check_branch
      %140 = sbr.rel (%p137) target = $region24
    $region23: #{channel_gate.2} parent=5 // pred_region
      %s141 = ssub.s32 %s9, 1
      %s142 = smul.u32 4, %s18
      %s143 = smul.u32 2, %s19
      %p144 = scmp.lt.s32.totalorder %s142, 7
      %s145 = scalar_select %p144, %s142, 7
      %p146 = scmp.lt.s32.totalorder %s143, 1
      %s147 = scalar_select %p146, %s143, 1
      %s148 = smul.addr %s145, 2
      %s149 = sadd.s32 %s147, %s148
      %s150 = smul.addr %s149, 8
      %s151 = scalar_lea.vmem %s0, %s150
      %p152 = pneg %p49
      %p153 = pneg %p46
      %p154 = pneg %p75
      %p155 = pneg %p72
      %s156 = smul.u32 4, %s18
      %p157 = scmp.lt.s32.totalorder %s156, 7
      %s158 = scalar_select %p157, %s156, 7
      %s159 = smul.addr %s158, 8
      %s160 = scalar_lea.vmem %s1, %s159
      %p161 = pneg %p101
      %p162 = pneg %p98
      %s163 = smul.u32 4, %s18
      %p164 = scmp.lt.s32.totalorder %s163, 7
      %s165 = scalar_select %p164, %s163, 7
      %s166 = smul.addr %s165, 8
      %s167 = scalar_lea.vmem %s2, %s166
      %s168 = smul.u32 4, %s18
      %s169 = smul.u32 2, %s19
      %p170 = scmp.lt.s32.totalorder %s168, 7
      %s171 = scalar_select %p170, %s168, 7
      %p172 = scmp.lt.s32.totalorder %s169, 1
      %s173 = scalar_select %p172, %s169, 1
      %s174 = smul.addr %s171, 2
      %s175 = sadd.s32 %s173, %s174
      %s176 = smul.addr %s175, 8
      %s177 = scalar_lea.vmem %s0, %s176
      %s178 = smul.u32 4, %s18
      %s179 = smul.u32 2, %s19
      %s180 = smul.u32 4, %s18
      %p181 = scmp.lt.s32.totalorder %s180, 7
      %s182 = scalar_select %p181, %s180, 7
      %s183 = smul.addr %s182, 8
      %s184 = scalar_lea.vmem %s1, %s183
      %s185 = smul.u32 4, %s18
      %s186 = smul.u32 4, %s18
      %p187 = scmp.lt.s32.totalorder %s186, 7
      %s188 = scalar_select %p187, %s186, 7
      %s189 = smul.addr %s188, 8
      %s190 = scalar_lea.vmem %s2, %s189
      %s191 = smul.u32 4, %s18
      %p192 = scmp.eq.s32.totalorder %s19, 0
      // Predicated region
      $region25: #{channel_gate.2} parent=23 // pred_check
        %p193 = pneg %p192
      $region26: #{channel_gate.2} parent=23 // pred_check_branch
        %195 = sbr.rel (%p193) target = $region28
      $region27: #{channel_gate.2} parent=23 // pred_region
        %vm196 = vcmask 7168
        %197 = vst.msk [vmem:[%s184] sm:$0xff] %vm196, 0.0
        %198 = vst.msk [vmem:[%s184 + $0x8] sm:$0xff] %vm196, 0.0
        %199 = vst.msk [vmem:[%s184 + $0x10] sm:$0xff] %vm196, 0.0
        %200 = vst.msk [vmem:[%s184 + $0x18] sm:$0xff] %vm196, 0.0
        %201 = vst.msk [vmem:[%s190] sm:$0xff] %vm196, -inf
        %202 = vst.msk [vmem:[%s190 + $0x8] sm:$0xff] %vm196, -inf
        %203 = vst.msk [vmem:[%s190 + $0x10] sm:$0xff] %vm196, -inf
        %204 = vst.msk [vmem:[%s190 + $0x18] sm:$0xff] %vm196, -inf
      $region28: #{channel_gate.2} parent=23 // pred_fallthru
        _
      %v205 = vld [vmem:[%s177] sm:$0xff]
      %v206 = vld [vmem:[%s177 + $0x8] sm:$0xff]
      %v207 = vld [vmem:[%s177 + $0x10] sm:$0xff]
      %v208 = vld [vmem:[%s177 + $0x18] sm:$0xff]
      %v209 = vld [vmem:[%s177 + $0x20] sm:$0xff]
      %v210 = vld [vmem:[%s177 + $0x28] sm:$0xff]
      %v211 = vld [vmem:[%s177 + $0x30] sm:$0xff]
      %v212 = vld [vmem:[%s177 + $0x38] sm:$0xff]
      %v213 = vld [vmem:[%s184] sm:$0xff]
      %v214 = vld [vmem:[%s184 + $0x8] sm:$0xff]
      %v215 = vld [vmem:[%s184 + $0x10] sm:$0xff]
      %v216 = vld [vmem:[%s184 + $0x18] sm:$0xff]
      %v217 = vadd.f32 %v205, %v206
      %218 = vadd.xlane.f32.xlu0 %v217
      %v219 = vpop.xlane.xlu0 %218
      %v220 = vadd.f32 %v207, %v208
      %221 = vadd.xlane.f32.xlu0 %v220
      %v222 = vpop.xlane.xlu0 %221
      %v223 = vadd.f32 %v209, %v210
      %224 = vadd.xlane.f32.xlu0 %v223
      %v225 = vpop.xlane.xlu0 %224
      %v226 = vadd.f32 %v211, %v212
      %227 = vadd.xlane.f32.xlu0 %v226
      %v228 = vpop.xlane.xlu0 %227
      %v229 = vadd.f32 %v213, %v219
      %v230 = vadd.f32 %v214, %v222
      %v231 = vadd.f32 %v215, %v225
      %v232 = vadd.f32 %v216, %v228
      %vm233 = vcmask 7168
      %234 = vst.msk [vmem:[%s184] sm:$0xff] %vm233, %v229
      %235 = vst.msk [vmem:[%s184 + $0x8] sm:$0xff] %vm233, %v230
      %236 = vst.msk [vmem:[%s184 + $0x10] sm:$0xff] %vm233, %v231
      %237 = vst.msk [vmem:[%s184 + $0x18] sm:$0xff] %vm233, %v232
      %v238 = vld [vmem:[%s190] sm:$0xff]
      %v239 = vld [vmem:[%s190 + $0x8] sm:$0xff]
      %v240 = vld [vmem:[%s190 + $0x10] sm:$0xff]
      %v241 = vld [vmem:[%s190 + $0x18] sm:$0xff]
      %v242 = vmax.f32 %v205, %v206
      %243 = vmax.xlane.f32.xlu0 %v242
      %v244 = vpop.xlane.xlu0 %243
      %v245 = vmax.f32 %v207, %v208
      %246 = vmax.xlane.f32.xlu0 %v245
      %v247 = vpop.xlane.xlu0 %246
      %v248 = vmax.f32 %v209, %v210
      %249 = vmax.xlane.f32.xlu0 %v248
      %v250 = vpop.xlane.xlu0 %249
      %v251 = vmax.f32 %v211, %v212
      %252 = vmax.xlane.f32.xlu0 %v251
      %v253 = vpop.xlane.xlu0 %252
      %v254 = vmax.f32 %v238, %v244
      %v255 = vmax.f32 %v239, %v247
      %v256 = vmax.f32 %v240, %v250
      %v257 = vmax.f32 %v241, %v253
      %258 = vst.msk [vmem:[%s190] sm:$0xff] %vm233, %v254
      %259 = vst.msk [vmem:[%s190 + $0x8] sm:$0xff] %vm233, %v255
      %260 = vst.msk [vmem:[%s190 + $0x10] sm:$0xff] %vm233, %v256
      %261 = vst.msk [vmem:[%s190 + $0x18] sm:$0xff] %vm233, %v257
      %s262 = smul.u32 4, %s18
      %p263 = scmp.lt.s32.totalorder %s262, 7
      %s264 = scalar_select %p263, %s262, 7
      %s265 = smul.addr %s264, 8
      %s266 = scalar_lea.vmem %s1, %s265
      %s267 = smul.u32 4, %s18
      %p268 = scmp.lt.s32.totalorder %s267, 7
      %s269 = scalar_select %p268, %s267, 7
      %s270 = smul.addr %s269, 8
      %s271 = scalar_lea.vmem %s2, %s270
      // Predicated region
      $region29: #{channel_gate.2} parent=23 // pred_check
        %p272 = pneg %p72
      $region30: #{channel_gate.2} parent=23 // pred_check_branch
        %274 = sbr.rel (%p272) target = $region32
      $region31: #{channel_gate.2} parent=23 // pred_region
        %s275 = smul.u32 4, %s18
      $region32: #{channel_gate.2} parent=23 // pred_fallthru
        _
      // Predicated region
      $region33: #{channel_gate.2} parent=23 // pred_check
        %p276 = pneg %p98
      $region34: #{channel_gate.2} parent=23 // pred_check_branch
        %278 = sbr.rel (%p276) target = $region36
      $region35: #{channel_gate.2} parent=23 // pred_region
        %s279 = smul.u32 4, %s18
      $region36: #{channel_gate.2} parent=23 // pred_fallthru
        _
    $region24: #{channel_gate.2} parent=5 // pred_fallthru
      _
    %p280 = scmp.le.s32.totalorder 2, %s9
    // Predicated region
    $region37: #{channel_gate.2} parent=5 // pred_check
      %p281 = pneg %p280
    $region38: #{channel_gate.2} parent=5 // pred_check_branch
      %283 = sbr.rel (%p281) target = $region40
    $region39: #{channel_gate.2} parent=5 // pred_region
      %s284 = ssub.s32 %s9, 2
      // Predicated region
      $region41: #{channel_gate.2} parent=39 // pred_check
        %p285 = pneg %p78
      $region42: #{channel_gate.2} parent=39 // pred_check_branch
        %287 = sbr.rel (%p285) target = $region44
      $region43: #{channel_gate.2} parent=39 // pred_region
        %s288 = smul.u32 4, %s20
        %p289 = scmp.lt.s32.totalorder %s288, 7
        %s290 = scalar_select %p289, %s288, 7
        %s291 = smul.addr %s290, 8
        %s292 = scalar_lea.vmem %s1, %s291
      $region44: #{channel_gate.2} parent=39 // pred_fallthru
        _
      // Predicated region
      $region45: #{channel_gate.2} parent=39 // pred_check
        %p293 = pneg %p104
      $region46: #{channel_gate.2} parent=39 // pred_check_branch
        %295 = sbr.rel (%p293) target = $region48
      $region47: #{channel_gate.2} parent=39 // pred_region
        %s296 = smul.u32 4, %s20
        %p297 = scmp.lt.s32.totalorder %s296, 7
        %s298 = scalar_select %p297, %s296, 7
        %s299 = smul.addr %s298, 8
        %s300 = scalar_lea.vmem %s2, %s299
      $region48: #{channel_gate.2} parent=39 // pred_fallthru
        _
    $region40: #{channel_gate.2} parent=5 // pred_fallthru
      _
  $region6: #{channel_gate.2} parent=0 // loop_footer
    %s13 = sadd.s32 1, %s9
  $region7: #{channel_gate.2} parent=0 // loop_footer_branch
    %8 = sbr.rel target = $region3
  $region8: #{channel_gate.2} parent=0 // loop_exit
    _

// kernel: channel_gate.3
$region0: #{channel_gate.3}
  #allocation0 [shape = 'u32[]', space=smem, size = 0x4, offset = 0x4, fixed_abs, tag = 'smem constant byte address 0x4 - core index']
  #allocation1 [shape = 'u32[144,128]{1,0:T(1,128)}', space=vmem, size = 0x12000, scoped, tag = 'internal scratch']
  %s0 = inlined_call_operand.vmem [shape: f32[64,256], index: 0, kind: input, shape index: {}]
  %s1 = inlined_call_operand.vmem [shape: f32[64,1], index: 1, kind: input, shape index: {}]
  %s2 = inlined_call_operand.vmem [shape: f32[64,256], index: 2, kind: output, shape index: {}]
  %s3 = sld [smem:[#allocation0]]
  $region41: #{channel_gate.3} parent=0
    _
  %s5 = ssub.s32 1, %s3
  %s6 = scalar_select 0, %s5, %s3
  loop: start=0, step=1, limit=4
  $region2: #{channel_gate.3} parent=0 // loop_pre_header
    _
  $region3: #{channel_gate.3} parent=0 // loop_header
    %s8 = sphi 0, %s12
    %p9 = scmp.ge.s32.totalorder %s8, 4
    %s15 = sphi 0, %s27
    %s16 = sphi 0, %s23
    %s17 = sphi 0, %s15
    %s18 = sphi 0, %s16
    %s19 = sphi 0, %s17
    %s20 = sphi 0, %s18
    %s32 = sphi 0, %s34
    %s35 = sphi 0, %s32
    %s36 = sphi 0, %s35
    %s52 = sphi 0, %s36
    %s58 = sphi 0, %s60
    %s61 = sphi 0, %s58
    %s62 = sphi 0, %s61
    %s78 = sphi 0, %s62
    %s86 = sphi 0, %s88
    %s89 = sphi 0, %s86
    %s90 = sphi 0, %s89
    %s106 = sphi 0, %s90
  $region4: #{channel_gate.3} parent=0 // loop_header_branch
    %11 = sbr.rel (%p9) target = $region8
  $region5: #{channel_gate.3} parent=0 // loop_body
    %s13 = ssub.s32 %s8, 1
    %s14 = ssub.s32 %s8, 2
    %s21 = sadd.s32 1, %s16
    %p22 = scmp.ge.s32.totalorder %s21, 1
    %s23 = scalar_select %p22, 0, %s21
    %s24 = sadd.s32 1, %s15
    %s25 = scalar_select %p22, %s24, %s15
    %p26 = scmp.ge.s32.totalorder %s25, 2
    %s27 = scalar_select %p26, 0, %s25
    %s28 = ssub.s32 %s15, %s27
    %s29 = ssub.s32 %s16, %s23
    %s30 = sor.u32 %s28, %s29
    %p31 = scmp.eq.s32.totalorder %s30, 0
    %s33 = sadd.s32 %s32, 1
    %s34 = scalar_select %p31, %s32, %s33
    %p37 = pneg %p31
    %p38 = scmp.eq.s32.totalorder %s8, 1
    %p39 = por %p37, %p38
    %p40 = scmp.ne.s32.totalorder %s32, %s35
    %p41 = scmp.eq.s32.totalorder %s8, 0
    %p42 = por %p40, %p41
    %p43 = scmp.ne.s32.totalorder %s32, %s35
    %p44 = scmp.eq.s32.totalorder %s13, 1
    %p45 = por %p43, %p44
    %p46 = scmp.ne.s32.totalorder %s35, %s36
    %p47 = scmp.eq.s32.totalorder %s13, 0
    %p48 = por %p46, %p47
    %p49 = scmp.ne.s32.totalorder %s35, %s36
    %p50 = scmp.eq.s32.totalorder %s14, 1
    %p51 = por %p49, %p50
    %p53 = scmp.ne.s32.totalorder %s36, %s52
    %p54 = scmp.eq.s32.totalorder %s14, 0
    %p55 = por %p53, %p54
    %s56 = ssub.s32 %s15, %s27
    %p57 = scmp.eq.s32.totalorder %s56, 0
    %s59 = sadd.s32 %s58, 1
    %s60 = scalar_select %p57, %s58, %s59
    %p63 = pneg %p57
    %p64 = scmp.eq.s32.totalorder %s8, 1
    %p65 = por %p63, %p64
    %p66 = scmp.ne.s32.totalorder %s58, %s61
    %p67 = scmp.eq.s32.totalorder %s8, 0
    %p68 = por %p66, %p67
    %p69 = scmp.ne.s32.totalorder %s58, %s61
    %p70 = scmp.eq.s32.totalorder %s13, 1
    %p71 = por %p69, %p70
    %p72 = scmp.ne.s32.totalorder %s61, %s62
    %p73 = scmp.eq.s32.totalorder %s13, 0
    %p74 = por %p72, %p73
    %p75 = scmp.ne.s32.totalorder %s61, %s62
    %p76 = scmp.eq.s32.totalorder %s14, 1
    %p77 = por %p75, %p76
    %p79 = scmp.ne.s32.totalorder %s62, %s78
    %p80 = scmp.eq.s32.totalorder %s14, 0
    %p81 = por %p79, %p80
    %s82 = ssub.s32 %s15, %s27
    %s83 = ssub.s32 %s16, %s23
    %s84 = sor.u32 %s82, %s83
    %p85 = scmp.eq.s32.totalorder %s84, 0
    %s87 = sadd.s32 %s86, 1
    %s88 = scalar_select %p85, %s86, %s87
    %p91 = pneg %p85
    %p92 = scmp.eq.s32.totalorder %s8, 1
    %p93 = por %p91, %p92
    %p94 = scmp.ne.s32.totalorder %s86, %s89
    %p95 = scmp.eq.s32.totalorder %s8, 0
    %p96 = por %p94, %p95
    %p97 = scmp.ne.s32.totalorder %s86, %s89
    %p98 = scmp.eq.s32.totalorder %s13, 1
    %p99 = por %p97, %p98
    %p100 = scmp.ne.s32.totalorder %s89, %s90
    %p101 = scmp.eq.s32.totalorder %s13, 0
    %p102 = por %p100, %p101
    %p103 = scmp.ne.s32.totalorder %s89, %s90
    %p104 = scmp.eq.s32.totalorder %s14, 1
    %p105 = por %p103, %p104
    %p107 = scmp.ne.s32.totalorder %s90, %s106
    %p108 = scmp.eq.s32.totalorder %s14, 0
    %p109 = por %p107, %p108
    %p110 = scmp.le.s32.totalorder 1, %s8
    %p111 = scmp.lt.s32.totalorder %s8, 3
    %p112 = pnand %p110, %p111
    %p113 = pneg %p112
    // Predicated region
    $region9: #{channel_gate.3} parent=5 // pred_check
      _
    $region10: #{channel_gate.3} parent=5 // pred_check_branch
      %115 = sbr.rel (%p112) target = $region12
    $region11: #{channel_gate.3} parent=5 // pred_region
      %s116 = ssub.s32 %s8, 1
    $region12: #{channel_gate.3} parent=5 // pred_fallthru
      _
    %p117 = scmp.lt.s32.totalorder %s8, 2
    // Predicated region
    $region13: #{channel_gate.3} parent=5 // pred_check
      %p118 = pneg %p117
    $region14: #{channel_gate.3} parent=5 // pred_check_branch
      %120 = sbr.rel (%p118) target = $region16
    $region15: #{channel_gate.3} parent=5 // pred_region
      // Predicated region
      $region17: #{channel_gate.3} parent=15 // pred_check
        %p121 = pneg %p42
      $region18: #{channel_gate.3} parent=15 // pred_check_branch
        %123 = sbr.rel (%p121) target = $region20
      $region19: #{channel_gate.3} parent=15 // pred_region
        %s124 = smul.u32 4, %s15
        %s125 = smul.u32 2, %s16
        %p126 = scmp.lt.s32.totalorder %s124, 7
        %s127 = scalar_select %p126, %s124, 7
        %p128 = scmp.lt.s32.totalorder %s125, 1
        %s129 = scalar_select %p128, %s125, 1
        %s130 = smul.addr %s127, 2
        %s131 = sadd.s32 %s129, %s130
        %s132 = smul.addr %s131, 8
        %s133 = scalar_lea.vmem %s0, %s132
        %s134 = smul.u32 4, %s15
        %s135 = smul.u32 2, %s16
      $region20: #{channel_gate.3} parent=15 // pred_fallthru
        _
      // Predicated region
      $region21: #{channel_gate.3} parent=15 // pred_check
        %p136 = pneg %p68
      $region22: #{channel_gate.3} parent=15 // pred_check_branch
        %138 = sbr.rel (%p136) target = $region24
      $region23: #{channel_gate.3} parent=15 // pred_region
        %s139 = smul.u32 4, %s15
        %p140 = scmp.lt.s32.totalorder %s139, 7
        %s141 = scalar_select %p140, %s139, 7
        %s142 = smul.addr %s141, 8
        %s143 = scalar_lea.vmem %s1, %s142
        %s144 = smul.u32 4, %s15
      $region24: #{channel_gate.3} parent=15 // pred_fallthru
        _
    $region16: #{channel_gate.3} parent=5 // pred_fallthru
      _
    %p145 = scmp.le.s32.totalorder 1, %s8
    %p146 = scmp.lt.s32.totalorder %s8, 3
    %p147 = pnand %p145, %p146
    %p148 = pneg %p147
    // Predicated region
    $region25: #{channel_gate.3} parent=5 // pred_check
      _
    $region26: #{channel_gate.3} parent=5 // pred_check_branch
      %150 = sbr.rel (%p147) target = $region28
    $region27: #{channel_gate.3} parent=5 // pred_region
      %s151 = ssub.s32 %s8, 1
      %s152 = smul.u32 4, %s17
      %s153 = smul.u32 2, %s18
      %p154 = scmp.lt.s32.totalorder %s152, 7
      %s155 = scalar_select %p154, %s152, 7
      %p156 = scmp.lt.s32.totalorder %s153, 1
      %s157 = scalar_select %p156, %s153, 1
      %s158 = smul.addr %s155, 2
      %s159 = sadd.s32 %s157, %s158
      %s160 = smul.addr %s159, 8
      %s161 = scalar_lea.vmem %s0, %s160
      %p162 = pneg %p48
      %p163 = pneg %p45
      %s164 = smul.u32 4, %s17
      %p165 = scmp.lt.s32.totalorder %s164, 7
      %s166 = scalar_select %p165, %s164, 7
      %s167 = smul.addr %s166, 8
      %s168 = scalar_lea.vmem %s1, %s167
      %p169 = pneg %p74
      %p170 = pneg %p71
      %p171 = pneg %p102
      %p172 = pneg %p99
      %s173 = smul.u32 4, %s17
      %s174 = smul.u32 2, %s18
      %p175 = scmp.lt.s32.totalorder %s173, 7
      %s176 = scalar_select %p175, %s173, 7
      %p177 = scmp.lt.s32.totalorder %s174, 1
      %s178 = scalar_select %p177, %s174, 1
      %s179 = smul.addr %s176, 2
      %s180 = sadd.s32 %s178, %s179
      %s181 = smul.addr %s180, 8
      %s182 = scalar_lea.vmem %s2, %s181
      %s183 = smul.u32 4, %s17
      %s184 = smul.u32 2, %s18
      %p185 = scmp.lt.s32.totalorder %s183, 7
      %s186 = scalar_select %p185, %s183, 7
      %p187 = scmp.lt.s32.totalorder %s184, 1
      %s188 = scalar_select %p187, %s184, 1
      %s189 = smul.addr %s186, 2
      %s190 = sadd.s32 %s188, %s189
      %s191 = smul.addr %s190, 8
      %s192 = scalar_lea.vmem %s0, %s191
      %s193 = smul.u32 4, %s17
      %s194 = smul.u32 2, %s18
      %s195 = smul.u32 4, %s17
      %p196 = scmp.lt.s32.totalorder %s195, 7
      %s197 = scalar_select %p196, %s195, 7
      %s198 = smul.addr %s197, 8
      %s199 = scalar_lea.vmem %s1, %s198
      %s200 = smul.u32 4, %s17
      %s201 = smul.u32 4, %s17
      %s202 = smul.u32 2, %s18
      %p203 = scmp.lt.s32.totalorder %s201, 7
      %s204 = scalar_select %p203, %s201, 7
      %p205 = scmp.lt.s32.totalorder %s202, 1
      %s206 = scalar_select %p205, %s202, 1
      %s207 = smul.addr %s204, 2
      %s208 = sadd.s32 %s206, %s207
      %s209 = smul.addr %s208, 8
      %s210 = scalar_lea.vmem %s2, %s209
      %s211 = smul.u32 4, %s17
      %s212 = smul.u32 2, %s18
      %v213 = vld [vmem:[%s192] sm:$0xff]
      %v214 = vld [vmem:[%s192 + $0x8] sm:$0xff]
      %v215 = vld [vmem:[%s192 + $0x10] sm:$0xff]
      %v216 = vld [vmem:[%s192 + $0x18] sm:$0xff]
      %v217 = vld [vmem:[%s192 + $0x20] sm:$0xff]
      %v218 = vld [vmem:[%s192 + $0x28] sm:$0xff]
      %v219 = vld [vmem:[%s192 + $0x30] sm:$0xff]
      %v220 = vld [vmem:[%s192 + $0x38] sm:$0xff]
      %v221 = vld [vmem:[%s199] sm:$0xff]
      %v222 = vld [vmem:[%s199 + $0x8] sm:$0xff]
      %v223 = vld [vmem:[%s199 + $0x10] sm:$0xff]
      %v224 = vld [vmem:[%s199 + $0x18] sm:$0xff]
      %226 = vset.pattern.permute.xlu0 0
      %227 = vperm.xlu0 %226, %v221
      %v228 = vpop.permute.xlu0 %227
      %231 = vset.pattern.permute.xlu0 0
      %232 = vperm.xlu0 %231, %v222
      %v233 = vpop.permute.xlu0 %232
      %236 = vset.pattern.permute.xlu0 0
      %237 = vperm.xlu0 %236, %v223
      %v238 = vpop.permute.xlu0 %237
      %241 = vset.pattern.permute.xlu0 0
      %242 = vperm.xlu0 %241, %v224
      %v243 = vpop.permute.xlu0 %242
      %v245 = vmul.f32 %v213, %v228
      %v246 = vmul.f32 %v214, %v228
      %v247 = vmul.f32 %v215, %v233
      %v248 = vmul.f32 %v216, %v233
      %v249 = vmul.f32 %v217, %v238
      %v250 = vmul.f32 %v218, %v238
      %v251 = vmul.f32 %v219, %v243
      %v252 = vmul.f32 %v220, %v243
      %253 = vst [vmem:[%s210] sm:$0xff] %v245
      %254 = vst [vmem:[%s210 + $0x8] sm:$0xff] %v246
      %255 = vst [vmem:[%s210 + $0x10] sm:$0xff] %v247
      %256 = vst [vmem:[%s210 + $0x18] sm:$0xff] %v248
      %257 = vst [vmem:[%s210 + $0x20] sm:$0xff] %v249
      %258 = vst [vmem:[%s210 + $0x28] sm:$0xff] %v250
      %259 = vst [vmem:[%s210 + $0x30] sm:$0xff] %v251
      %260 = vst [vmem:[%s210 + $0x38] sm:$0xff] %v252
      %s261 = smul.u32 4, %s17
      %s262 = smul.u32 2, %s18
      %p263 = scmp.lt.s32.totalorder %s261, 7
      %s264 = scalar_select %p263, %s261, 7
      %p265 = scmp.lt.s32.totalorder %s262, 1
      %s266 = scalar_select %p265, %s262, 1
      %s267 = smul.addr %s264, 2
      %s268 = sadd.s32 %s266, %s267
      %s269 = smul.addr %s268, 8
      %s270 = scalar_lea.vmem %s2, %s269
      // Predicated region
      $region29: #{channel_gate.3} parent=27 // pred_check
        %p271 = pneg %p99
      $region30: #{channel_gate.3} parent=27 // pred_check_branch
        %273 = sbr.rel (%p271) target = $region32
      $region31: #{channel_gate.3} parent=27 // pred_region
        %s274 = smul.u32 4, %s17
        %s275 = smul.u32 2, %s18
      $region32: #{channel_gate.3} parent=27 // pred_fallthru
        _
    $region28: #{channel_gate.3} parent=5 // pred_fallthru
      _
    %p276 = scmp.le.s32.totalorder 2, %s8
    // Predicated region
    $region33: #{channel_gate.3} parent=5 // pred_check
      %p277 = pneg %p276
    $region34: #{channel_gate.3} parent=5 // pred_check_branch
      %279 = sbr.rel (%p277) target = $region36
    $region35: #{channel_gate.3} parent=5 // pred_region
      %s280 = ssub.s32 %s8, 2
      // Predicated region
      $region37: #{channel_gate.3} parent=35 // pred_check
        %p281 = pneg %p105
      $region38: #{channel_gate.3} parent=35 // pred_check_branch
        %283 = sbr.rel (%p281) target = $region40
      $region39: #{channel_gate.3} parent=35 // pred_region
        %s284 = smul.u32 4, %s19
        %s285 = smul.u32 2, %s20
        %p286 = scmp.lt.s32.totalorder %s284, 7
        %s287 = scalar_select %p286, %s284, 7
        %p288 = scmp.lt.s32.totalorder %s285, 1
        %s289 = scalar_select %p288, %s285, 1
        %s290 = smul.addr %s287, 2
        %s291 = sadd.s32 %s289, %s290
        %s292 = smul.addr %s291, 8
        %s293 = scalar_lea.vmem %s2, %s292
      $region40: #{channel_gate.3} parent=35 // pred_fallthru
        _
    $region36: #{channel_gate.3} parent=5 // pred_fallthru
      _
  $region6: #{channel_gate.3} parent=0 // loop_footer
    %s12 = sadd.s32 1, %s8
  $region7: #{channel_gate.3} parent=0 // loop_footer_branch
    %7 = sbr.rel target = $region3
  $region8: #{channel_gate.3} parent=0 // loop_exit
    _

</llo_original>
